<compile_context>
chip_gen: v7x
topology: tpu7x:2x2x1
jax: 0.10.0
libtpu: 0.0.40
codegen_flags: <defaults>
</compile_context>

<pallas_src>
import jax
import jax.numpy as jnp
from jax.experimental import pallas as pl
from jax.experimental.pallas import tpu as pltpu  # noqa: F401  (TPU backend)


def _copy_kernel(x_ref, o_ref):
    # forward(x) == x
    o_ref[...] = x_ref[...]


def _lane_dense_2d_shape(total: int) -> tuple[int, int]:
    """Pick a (rows, cols) view with cols a wide multiple of 128 when possible."""
    if total % 128 != 0:
        return 1, total  # fallback: single full-extent row (block == full array)
    for cols in (2048, 1024, 512, 256, 128):
        if total % cols == 0:
            return total // cols, cols
    return total // 128, 128  # unreachable, kept for clarity


# Keep a single block comfortably inside VMEM: in+out double-buffered blocks
# must fit the ~32 MiB default scoped limit (64 MiB physical on v7x).
_SINGLE_BLOCK_BYTES_CAP = 4 * 1024 * 1024


def _pallas_identity_copy_2d(x2d: jax.Array) -> jax.Array:
    rows, cols = x2d.shape
    itemsize = jnp.dtype(x2d.dtype).itemsize
    nbytes = rows * cols * itemsize

    if nbytes <= _SINGLE_BLOCK_BYTES_CAP or rows == 1:
        # Single grid step: whole lane-dense slab is one block (no grid, no
        # per-step overhead, unmasked stores), output aliases the input buffer.
        return pl.pallas_call(
            _copy_kernel,
            out_shape=jax.ShapeDtypeStruct((rows, cols), x2d.dtype),
            input_output_aliases={0: 0},
        )(x2d)

    # Large-input fallback: tile rows so each block stays ~<= 4 MiB
    # (safe for v5e/v6e/v7x VMEM with double buffering of input and output).
    row_tile = max(8, _SINGLE_BLOCK_BYTES_CAP // (cols * itemsize))
    row_tile = min(row_tile, rows)
    grid = (pl.cdiv(rows, row_tile),)
    return pl.pallas_call(
        _copy_kernel,
        out_shape=jax.ShapeDtypeStruct((rows, cols), x2d.dtype),
        grid=grid,
        in_specs=[pl.BlockSpec((row_tile, cols), lambda i: (i, 0))],
        out_specs=pl.BlockSpec((row_tile, cols), lambda i: (i, 0)),
        input_output_aliases={0: 0},
    )(x2d)


@jax.jit
def dummy_model_forward(x: jax.Array) -> jax.Array:
    """Identity forward pass (DummyModel.forward) as a Pallas TPU kernel.

    NOTE: in production code the optimal implementation is simply `return x`;
    the Pallas copy below exists only to provide an explicit kernel boundary.
    """
    orig_shape = x.shape
    total = int(x.size)
    rows, cols = _lane_dense_2d_shape(total)
    y2d = _pallas_identity_copy_2d(x.reshape(rows, cols))
    return y2d.reshape(orig_shape)


def init_dummy_model_params(hidden_dim: int, time_steps: int, output_dim: int,
                            key: jax.Array):
    """Deterministic init of the (unused) fc layer, mirroring __init__."""
    in_features = hidden_dim * time_steps
    k_w, k_b = jax.random.split(key)
    bound = 1.0 / jnp.sqrt(in_features)
    # PyTorch nn.Linear default init: U(-bound, bound) for weight and bias.
    w = jax.random.uniform(k_w, (output_dim, in_features),
                           minval=-bound, maxval=bound, dtype=jnp.float32)
    b = jax.random.uniform(k_b, (output_dim,),
                           minval=-bound, maxval=bound, dtype=jnp.float32)
    return {"fc": {"weight": w, "bias": b}}  # not used in forward (by design)


if __name__ == "__main__":
    key = jax.random.PRNGKey(0)
    k_x, k_p = jax.random.split(key)

    batch = 2
    time_steps = 8
    hidden_dim = 32
    output_dim = 16

    # Parameters exist per __init__ but are unused in forward (identity).
    params = init_dummy_model_params(hidden_dim, time_steps, output_dim, k_p)

    x = jax.random.normal(k_x, (batch, time_steps, hidden_dim), dtype=jnp.float32)

    y = dummy_model_forward(x)
    y = jax.block_until_ready(y)

    assert y.shape == x.shape and y.dtype == x.dtype
    assert bool(jnp.array_equal(y, x))

    print("KERNEL_OK")
</pallas_src>

<mosaic_0001>
module attributes {stable_mosaic.version = 11 : i64} {
  func.func @_copy_kernel(%arg0: memref<1x512xf32, #tpu.memory_space<vmem>>, %arg1: memref<1x512xf32, #tpu.memory_space<vmem>>) attributes {dimension_semantics = [], scalar_prefetch = 0 : i64, scratch_operands = 0 : i64, tpu.core_type = #tpu.core_type<tc>} {
    %c0 = arith.constant 0 : index
    %c0_0 = arith.constant 0 : index
    %0 = vector.load %arg0[%c0, %c0_0] : memref<1x512xf32, #tpu.memory_space<vmem>>, vector<1x512xf32>
    %c0_1 = arith.constant 0 : index
    %c0_2 = arith.constant 0 : index
    %1 = vector.load %arg1[%c0_1, %c0_2] : memref<1x512xf32, #tpu.memory_space<vmem>>, vector<1x512xf32>
    tpu.vector_store %arg1[%c0_1, %c0_2], %0 {strides = array<i32>} : memref<1x512xf32, #tpu.memory_space<vmem>>, vector<1x512xf32>,
    return
  }
}

</mosaic_0001>

<llo_original>
// kernel: dummy_model_forward.1
$region0: #{dummy_model_forward.1}
  #allocation0 [shape = 'u32[]', space=smem, size = 0x4, offset = 0x4, fixed_abs, tag = 'smem constant byte address 0x4 - core index']
  #allocation1 [shape = 'u32[144,128]{1,0:T(1,128)}', space=vmem, size = 0x12000, scoped, tag = 'internal scratch']
  %s0 = inlined_call_operand.vmem [shape: f32[1,512], index: 0, kind: input, shape index: {}, may-alias: {0,1}]
  %s1 = inlined_call_operand.vmem [shape: f32[1,512], index: 1, kind: output, shape index: {}, may-alias: {0,1}]
  %s2 = sld [smem:[#allocation0]]
  $region14: #{dummy_model_forward.1} parent=0
    _
  %s4 = ssub.s32 1, %s2
  %s5 = scalar_select 0, %s4, %s2
  // Predicated region
  $region2: #{dummy_model_forward.1} parent=0 // pred_check
    _
  $region3: #{dummy_model_forward.1} parent=0 // pred_check_branch
    %7 = sbr.rel (0) target = $region5
  $region4: #{dummy_model_forward.1} parent=0 // pred_region
    _
  $region5: #{dummy_model_forward.1} parent=0 // pred_fallthru
    _
  %v8 = vld [vmem:[%s0] sm:$0xf]
  %v9 = vlaneseq
  %vm10 = vcmp.ge.s32.totalorder %v9, 0
  %vm11 = vcmp.lt.s32.totalorder %v9, 512
  %vm12 = vmand %vm10, %vm11
  %13 = vst.msk [vmem:[%s1] sm:$0xf] %vm12, %v8
  // Predicated region
  $region6: #{dummy_model_forward.1} parent=0 // pred_check
    _
  $region7: #{dummy_model_forward.1} parent=0 // pred_check_branch
    %15 = sbr.rel (0) target = $region9
  $region8: #{dummy_model_forward.1} parent=0 // pred_region
    _
  $region9: #{dummy_model_forward.1} parent=0 // pred_fallthru
    _
  // Predicated region
  $region10: #{dummy_model_forward.1} parent=0 // pred_check
    _
  $region11: #{dummy_model_forward.1} parent=0 // pred_check_branch
    %17 = sbr.rel (0) target = $region13
  $region12: #{dummy_model_forward.1} parent=0 // pred_region
    _
  $region13: #{dummy_model_forward.1} parent=0 // pred_fallthru
    _

</llo_original>
